<compile_context>
chip_gen: v5e
topology: v5e:2x2
jax: 0.10.0
libtpu: 0.0.40
codegen_flags: <defaults>
</compile_context>

<pallas_src>
import jax
import jax.numpy as jnp
from jax.experimental import pallas as pl
from jax.experimental.pallas import tpu as pltpu


def mysquad_kernel(xs_ref, xe_ref, w_ref, sp_ref, ep_ref):
    # Block shapes: xs/xe/w (BN, L) f32 in, sp/ep (BN, L) f32 out.
    # xs/xe already hold (x@Wqa - mask@Wqa) per token; the remaining per-row
    # constant (bqa + mask@Wqa) cancels exactly in the softmax and is dropped.
    w = w_ref[...]                                    # (BN, L) mixing weights
    for x_ref, out_ref in ((xs_ref, sp_ref), (xe_ref, ep_ref)):
        lg = w * x_ref[...]                           # logits (up to seq-constant)
        mx = jnp.max(lg, axis=-1, keepdims=True)      # softmax over sequence dim
        e = jnp.exp(lg - mx)
        s = jnp.sum(e, axis=-1, keepdims=True)
        out_ref[...] = e / s                          # exact divide: rows sum to 1


def _pick_bn(N, L, *, vmem_budget=16 << 20):
    """Batch rows per grid step.

    Per step the pipeline holds 3 input + 2 output (BN, L) f32 blocks, each
    double-buffered.  Prefer the largest sublane-aligned (multiple of 8)
    divisor of N that fits the budget AND leaves >= 2 grid steps, so the
    "parallel" batch axis can span both TensorCores on v7x.  Fall back to the
    whole batch (full-array block dims are always layout-legal)."""
    per_row = 5 * L * 4 * 2
    cap = max(1, vmem_budget // per_row)
    aligned = [bn for bn in range(8, min(N, cap) + 1, 8) if N % bn == 0]
    two_step = [bn for bn in aligned if N // bn >= 2]
    if two_step:
        return max(two_step)
    if aligned:
        return max(aligned)
    return N


def mysquad_forward(input_ids, w, embed_table, mask_token, wqa, bqa):
    """Returns (start_probs, end_probs), each (N, L), softmaxed over the seq dim."""
    # TODO(synk): the full AutoModelForQuestionAnswering transformer has no clean
    # Pallas equivalent here; it is replaced by a deterministic linear QA head
    # (D -> 2), which is then algebraically pre-projected onto the vocab table.
    del bqa  # constant over the sequence -> cancels exactly in the softmax

    N, L = input_ids.shape
    V, D = embed_table.shape

    # Wrapper-side algebraic precompute (runs once per call, all f32):
    #   proj_table = embed_table @ Wqa          (V, 2)
    #   m_proj     = mask_token @ Wqa           (2,)
    #   x_shifted  = proj_table[ids] - m_proj   (N, L, 2)
    proj_table = embed_table.astype(jnp.float32) @ wqa.astype(jnp.float32)   # (V, 2)
    m_proj = mask_token.astype(jnp.float32) @ wqa.astype(jnp.float32)        # (2,)
    xp = jnp.take(proj_table, input_ids, axis=0)                             # (N, L, 2)
    xs = xp[..., 0] - m_proj[0]                                              # (N, L)
    xe = xp[..., 1] - m_proj[1]                                              # (N, L)
    w2 = w.astype(jnp.float32).reshape(N, L)                                 # (N, L)

    BN = _pick_bn(N, L)
    step_bytes = 5 * BN * L * 4 * 2   # 3 in + 2 out f32 blocks, double-buffered
    vmem_limit = int(min(32 << 20, max(2 << 20, 4 * step_bytes)))

    blk = lambda: pl.BlockSpec((BN, L), lambda n: (n, 0))

    start_probs, end_probs = pl.pallas_call(
        mysquad_kernel,
        out_shape=(jax.ShapeDtypeStruct((N, L), jnp.float32),
                   jax.ShapeDtypeStruct((N, L), jnp.float32)),
        grid_spec=pltpu.PrefetchScalarGridSpec(
            num_scalar_prefetch=0,
            grid=(N // BN,),
            in_specs=[blk(), blk(), blk()],          # xs, xe, w  (lane-dense f32)
            out_specs=[blk(), blk()],                # start / end probs (lane-dense)
        ),
        compiler_params=pltpu.CompilerParams(
            dimension_semantics=("parallel",),       # independent batch blocks
            vmem_limit_bytes=vmem_limit),
    )(xs, xe, w2)

    return start_probs, end_probs   # return_mode='start_logits' / 'end_logits'


if __name__ == "__main__":
    # Small deterministic setup consistent with the module's forward.
    N, L, D, V = 2, 8, 128, 32     # batch, seq, embeds_dim, vocab
    key = jax.random.PRNGKey(0)
    k1, k2, k3, k4 = jax.random.split(key, 4)

    # Deterministic "pretrained" parameters (synthetic).
    embed_table = jax.random.normal(k1, (V, D), jnp.float32) * 0.1   # embed_fn weight
    mask_token = embed_table[V - 1]                                  # mask_token_pt
    wqa = jax.random.normal(k2, (D, 2), jnp.float32) * 0.3           # surrogate QA head
    bqa = jnp.array([0.25, -0.5], jnp.float32)

    # Example inputs (input_mode='dict' path: input_ids are embedded first).
    input_ids = jax.random.randint(k3, (N, L), 0, V)
    w = jax.random.uniform(k4, (N, L)).astype(jnp.float32)

    start_p, end_p = mysquad_forward(input_ids, w, embed_table, mask_token, wqa, bqa)
    jax.block_until_ready((start_p, end_p))

    # Pure-JAX f32 reference mirroring the PyTorch module's forward exactly.
    x_ref = jnp.take(embed_table, input_ids, axis=0)
    xn_ref = w[..., None] * x_ref + (1.0 - w[..., None]) * mask_token
    logits_ref = xn_ref @ wqa + bqa
    ref_start = jax.nn.softmax(logits_ref[..., 0], axis=1)
    ref_end = jax.nn.softmax(logits_ref[..., 1], axis=1)
    assert jnp.allclose(start_p, ref_start, atol=1e-5), "start probs mismatch"
    assert jnp.allclose(end_p, ref_end, atol=1e-5), "end probs mismatch"
    assert jnp.allclose(jnp.sum(start_p, axis=1), 1.0, atol=1e-5), "rows not normalized"

    print("KERNEL_OK")
</pallas_src>

<mosaic_0001>
module attributes {stable_mosaic.version = 11 : i64} {
  func.func @mysquad_kernel(%arg0: i32, %arg1: memref<2x8xf32, #tpu.memory_space<vmem>>, %arg2: memref<2x8xf32, #tpu.memory_space<vmem>>, %arg3: memref<2x8xf32, #tpu.memory_space<vmem>>, %arg4: memref<2x8xf32, #tpu.memory_space<vmem>>, %arg5: memref<2x8xf32, #tpu.memory_space<vmem>>) attributes {dimension_semantics = [#tpu.dimension_semantics<parallel>], iteration_bounds = array<i64: 1>, scalar_prefetch = 0 : i64, scratch_operands = 0 : i64, tpu.core_type = #tpu.core_type<tc>, window_params = [{transform_indices = @transform_0, window_bounds = array<i64: 2, 8>}, {transform_indices = @transform_1, window_bounds = array<i64: 2, 8>}, {transform_indices = @transform_2, window_bounds = array<i64: 2, 8>}, {transform_indices = @transform_3, window_bounds = array<i64: 2, 8>}, {transform_indices = @transform_4, window_bounds = array<i64: 2, 8>}]} {
    %c0 = arith.constant 0 : index
    %c0_0 = arith.constant 0 : index
    %0 = vector.load %arg3[%c0, %c0_0] : memref<2x8xf32, #tpu.memory_space<vmem>>, vector<2x8xf32>
    %c0_1 = arith.constant 0 : index
    %c0_2 = arith.constant 0 : index
    %1 = vector.load %arg1[%c0_1, %c0_2] : memref<2x8xf32, #tpu.memory_space<vmem>>, vector<2x8xf32>
    %2 = arith.mulf %0, %1 : vector<2x8xf32>
    %cst = arith.constant dense<0xFF800000> : vector<2xf32>
    %3 = vector.multi_reduction <maximumf>, %2, %cst [1] : vector<2x8xf32> to vector<2xf32>
    %4 = vector.shape_cast %3 : vector<2xf32> to vector<2x1xf32>
    %5 = vector.broadcast %4 : vector<2x1xf32> to vector<2x8xf32>
    %6 = arith.subf %2, %5 : vector<2x8xf32>
    %7 = math.exp %6 : vector<2x8xf32>
    %cst_3 = arith.constant dense<0.000000e+00> : vector<2xf32>
    %8 = vector.multi_reduction <add>, %7, %cst_3 [1] : vector<2x8xf32> to vector<2xf32>
    %9 = vector.shape_cast %8 : vector<2xf32> to vector<2x1xf32>
    %10 = vector.broadcast %9 : vector<2x1xf32> to vector<2x8xf32>
    %11 = arith.divf %7, %10 : vector<2x8xf32>
    %c0_4 = arith.constant 0 : index
    %c0_5 = arith.constant 0 : index
    %12 = vector.load %arg4[%c0_4, %c0_5] : memref<2x8xf32, #tpu.memory_space<vmem>>, vector<2x8xf32>
    tpu.vector_store %arg4[%c0_4, %c0_5], %11 {strides = array<i32>} : memref<2x8xf32, #tpu.memory_space<vmem>>, vector<2x8xf32>,
    %c0_6 = arith.constant 0 : index
    %c0_7 = arith.constant 0 : index
    %13 = vector.load %arg2[%c0_6, %c0_7] : memref<2x8xf32, #tpu.memory_space<vmem>>, vector<2x8xf32>
    %14 = arith.mulf %0, %13 : vector<2x8xf32>
    %cst_8 = arith.constant dense<0xFF800000> : vector<2xf32>
    %15 = vector.multi_reduction <maximumf>, %14, %cst_8 [1] : vector<2x8xf32> to vector<2xf32>
    %16 = vector.shape_cast %15 : vector<2xf32> to vector<2x1xf32>
    %17 = vector.broadcast %16 : vector<2x1xf32> to vector<2x8xf32>
    %18 = arith.subf %14, %17 : vector<2x8xf32>
    %19 = math.exp %18 : vector<2x8xf32>
    %cst_9 = arith.constant dense<0.000000e+00> : vector<2xf32>
    %20 = vector.multi_reduction <add>, %19, %cst_9 [1] : vector<2x8xf32> to vector<2xf32>
    %21 = vector.shape_cast %20 : vector<2xf32> to vector<2x1xf32>
    %22 = vector.broadcast %21 : vector<2x1xf32> to vector<2x8xf32>
    %23 = arith.divf %19, %22 : vector<2x8xf32>
    %c0_10 = arith.constant 0 : index
    %c0_11 = arith.constant 0 : index
    %24 = vector.load %arg5[%c0_10, %c0_11] : memref<2x8xf32, #tpu.memory_space<vmem>>, vector<2x8xf32>
    tpu.vector_store %arg5[%c0_10, %c0_11], %23 {strides = array<i32>} : memref<2x8xf32, #tpu.memory_space<vmem>>, vector<2x8xf32>,
    return
  }
  func.func @transform_0(%arg0: i32) -> (i32, i32) {
    %c0_i32 = arith.constant 0 : i32
    %c0_i32_0 = arith.constant 0 : i32
    return %arg0, %c0_i32 : i32, i32
  }
  func.func @transform_1(%arg0: i32) -> (i32, i32) {
    %c0_i32 = arith.constant 0 : i32
    %c0_i32_0 = arith.constant 0 : i32
    return %arg0, %c0_i32 : i32, i32
  }
  func.func @transform_2(%arg0: i32) -> (i32, i32) {
    %c0_i32 = arith.constant 0 : i32
    %c0_i32_0 = arith.constant 0 : i32
    return %arg0, %c0_i32 : i32, i32
  }
  func.func @transform_3(%arg0: i32) -> (i32, i32) {
    %c0_i32 = arith.constant 0 : i32
    %c0_i32_0 = arith.constant 0 : i32
    return %arg0, %c0_i32 : i32, i32
  }
  func.func @transform_4(%arg0: i32) -> (i32, i32) {
    %c0_i32 = arith.constant 0 : i32
    %c0_i32_0 = arith.constant 0 : i32
    return %arg0, %c0_i32 : i32, i32
  }
}

</mosaic_0001>

<llo_original>
// kernel: tpu_custom_call.1
$region0: #{tpu_custom_call.1}
  #allocation0 [shape = 'u32[]', space=smem, size = 0x4, offset = 0x4, fixed_abs, tag = 'smem constant byte address 0x4 - core index']
  #allocation1 [shape = 'u32[72,128]{1,0:T(1,128)}', space=vmem, size = 0x9000, scoped, tag = 'internal scratch']
  %s0 = inlined_call_operand.hbm [shape: f32[2,8], index: 0, kind: input, shape index: {}]
  %s1 = inlined_call_operand.hbm [shape: f32[2,8], index: 1, kind: input, shape index: {}]
  %s2 = inlined_call_operand.hbm [shape: f32[2,8], index: 2, kind: input, shape index: {}]
  %s3 = inlined_call_operand.hbm [shape: f32[2,8], index: 3, kind: output, shape index: {0}]
  %s4 = inlined_call_operand.hbm [shape: f32[2,8], index: 4, kind: output, shape index: {1}]
  %5 = xla_tuple %s3, %s4
  %s6 = sld [smem:[#allocation0]]
  $region42: #{tpu_custom_call.1} parent=0
    _
  %s8 = ssub.s32 1, %s6
  %s9 = scalar_select 0, %s8, %s6
  $region1: #{tpu_custom_call.1} parent=0
    #allocation2 [shape = 'u8[1024]{0}', space=vmem, size = 0x400, scoped, tag = 'input window, operand 0, single buffered']
    #allocation3 [shape = 's32[1]{0}', space=sflag, size = 0x4, scoped, tag = 'scoped memory for tpu_custom_call.1']
    #allocation4 [shape = 's32[1]{0}', space=sflag, size = 0x4, scoped, tag = 'scoped memory for tpu_custom_call.1']
    #allocation5 [shape = 'u8[1024]{0}', space=vmem, size = 0x400, scoped, tag = 'input window, operand 1, single buffered']
    #allocation6 [shape = 's32[1]{0}', space=sflag, size = 0x4, scoped, tag = 'scoped memory for tpu_custom_call.1']
    #allocation7 [shape = 'u8[1024]{0}', space=vmem, size = 0x400, scoped, tag = 'input window, operand 2, single buffered']
    #allocation8 [shape = 'u8[1024]{0}', space=vmem, size = 0x400, scoped, tag = 'output window, operand 0, single buffered']
    #allocation9 [shape = 'u8[1024]{0}', space=vmem, size = 0x400, scoped, tag = 'output window, operand 1, single buffered']
    #allocation10 [shape = 's32[1]{0}', space=sflag, size = 0x4, scoped, tag = 'scoped memory for tpu_custom_call.1']
    %10 = vsyncpa [#allocation3], 0
    %11 = vsyncpa [#allocation6], 0
    %12 = vsyncpa [#allocation4], 0
    %13 = vsyncpa [#allocation10], 0
    // Predicated region
    $region2: #{tpu_custom_call.1} parent=1 // pred_check
      _
    $region3: #{tpu_custom_call.1} parent=1 // pred_check_branch
      %15 = sbr.rel (0) target = $region5
    $region4: #{tpu_custom_call.1} parent=1 // pred_region
      %17 = vsyncadd [#allocation3], 0
      %s19 = sshll.u32 %s0, 4
      %s20 = int_to_ptr.hbm [resolvable:$true] %s19
      %s21 = sshll.u32 [#allocation2], 4
      %s22 = int_to_ptr.vmem [resolvable:$true] %s21
      %24 = dma.hbm_to_vmem [thread:$0]  %s20, 32, %s22, [#allocation3]
    $region5: #{tpu_custom_call.1} parent=1 // pred_fallthru
      _
    // Predicated region
    $region6: #{tpu_custom_call.1} parent=1 // pred_check
      _
    $region7: #{tpu_custom_call.1} parent=1 // pred_check_branch
      %26 = sbr.rel (0) target = $region9
    $region8: #{tpu_custom_call.1} parent=1 // pred_region
      %28 = vsyncadd [#allocation6], 0
      %s30 = sshll.u32 %s1, 4
      %s31 = int_to_ptr.hbm [resolvable:$true] %s30
      %s32 = sshll.u32 [#allocation5], 4
      %s33 = int_to_ptr.vmem [resolvable:$true] %s32
      %35 = dma.hbm_to_vmem [thread:$0]  %s31, 32, %s33, [#allocation6]
    $region9: #{tpu_custom_call.1} parent=1 // pred_fallthru
      _
    // Predicated region
    $region10: #{tpu_custom_call.1} parent=1 // pred_check
      _
    $region11: #{tpu_custom_call.1} parent=1 // pred_check_branch
      %37 = sbr.rel (0) target = $region13
    $region12: #{tpu_custom_call.1} parent=1 // pred_region
      %39 = vsyncadd [#allocation6], 0
      %s41 = sshll.u32 %s2, 4
      %s42 = int_to_ptr.hbm [resolvable:$true] %s41
      %s43 = sshll.u32 [#allocation7], 4
      %s44 = int_to_ptr.vmem [resolvable:$true] %s43
      %46 = dma.hbm_to_vmem [thread:$0]  %s42, 32, %s44, [#allocation6]
    $region13: #{tpu_custom_call.1} parent=1 // pred_fallthru
      _
    // Predicated region
    $region14: #{tpu_custom_call.1} parent=1 // pred_check
      _
    $region15: #{tpu_custom_call.1} parent=1 // pred_check_branch
      %48 = sbr.rel (0) target = $region17
    $region16: #{tpu_custom_call.1} parent=1 // pred_region
      %50 = dma.done [#allocation3], 32
    $region17: #{tpu_custom_call.1} parent=1 // pred_fallthru
      _
    // Predicated region
    $region18: #{tpu_custom_call.1} parent=1 // pred_check
      _
    $region19: #{tpu_custom_call.1} parent=1 // pred_check_branch
      %52 = sbr.rel (0) target = $region21
    $region20: #{tpu_custom_call.1} parent=1 // pred_region
      %54 = dma.done [#allocation6], 32
    $region21: #{tpu_custom_call.1} parent=1 // pred_fallthru
      _
    // Predicated region
    $region22: #{tpu_custom_call.1} parent=1 // pred_check
      _
    $region23: #{tpu_custom_call.1} parent=1 // pred_check_branch
      %56 = sbr.rel (0) target = $region25
    $region24: #{tpu_custom_call.1} parent=1 // pred_region
      %58 = dma.done [#allocation6], 32
    $region25: #{tpu_custom_call.1} parent=1 // pred_fallthru
      _
    %v59 = vld [vmem:[#allocation7] sm:$0x3]
    %v60 = vld [vmem:[#allocation2] sm:$0x3]
    %v61 = vmul.f32 %v59, %v60
    %vm62 = vcmask 58368
    %v63 = vsel %vm62, %v61, -inf
    %64 = vmax.xlane.f32.xlu0 %v63
    %v65 = vpop.xlane.xlu0 %64
    %v66 = vsub.f32 %v61, %v65
    %v67 = vmul.f32 %v66, 1.442695
    %v68 = vpow.pop %v67
    %v69 = vsel %vm62, %v68, 0.0
    %70 = vadd.xlane.f32.xlu0 %v69
    %v71 = vpop.xlane.xlu0 %70
    %v72 = vrcp.pop %v71
    %v73 = vmul.f32 %v71, %v72
    %v74 = vsub.f32 1.0, %v73
    %v75 = vmul.f32 %v72, %v74
    %v76 = vadd.f32 %v72, %v75
    %vm77 = vweird.f32 %v71
    %vm78 = vweird.f32 %v72
    %vm79 = vmor %vm77, %vm78
    %v80 = vsel %vm79, %v72, %v76
    %v81 = vand.u32 2147483647, %v71
    %vm82 = vcmp.eq.f32.partialorder %v81, 8.507059e+37
    %v83 = vand.u32 %v71, 2147483648
    %v84 = vor.u32 1.1754944e-38, %v83
    %v85 = vsel %vm82, %v84, %v80
    %v86 = vmul.f32 %v68, %v85
    %87 = vst.msk [vmem:[#allocation8] sm:$0x3] %vm62, %v86
    %v88 = vld [vmem:[#allocation5] sm:$0x3]
    %v89 = vmul.f32 %v59, %v88
    %v90 = vsel %vm62, %v89, -inf
    %91 = vmax.xlane.f32.xlu0 %v90
    %v92 = vpop.xlane.xlu0 %91
    %v93 = vsub.f32 %v89, %v92
    %v94 = vmul.f32 %v93, 1.442695
    %v95 = vpow.pop %v94
    %v96 = vsel %vm62, %v95, 0.0
    %97 = vadd.xlane.f32.xlu0 %v96
    %v98 = vpop.xlane.xlu0 %97
    %v99 = vrcp.pop %v98
    %v100 = vmul.f32 %v98, %v99
    %v101 = vsub.f32 1.0, %v100
    %v102 = vmul.f32 %v99, %v101
    %v103 = vadd.f32 %v99, %v102
    %vm104 = vweird.f32 %v98
    %vm105 = vweird.f32 %v99
    %vm106 = vmor %vm104, %vm105
    %v107 = vsel %vm106, %v99, %v103
    %v108 = vand.u32 2147483647, %v98
    %vm109 = vcmp.eq.f32.partialorder %v108, 8.507059e+37
    %v110 = vand.u32 %v98, 2147483648
    %v111 = vor.u32 1.1754944e-38, %v110
    %v112 = vsel %vm109, %v111, %v107
    %v113 = vmul.f32 %v95, %v112
    %114 = vst.msk [vmem:[#allocation9] sm:$0x3] %vm62, %v113
    // Predicated region
    $region26: #{tpu_custom_call.1} parent=1 // pred_check
      _
    $region27: #{tpu_custom_call.1} parent=1 // pred_check_branch
      %116 = sbr.rel (0) target = $region29
    $region28: #{tpu_custom_call.1} parent=1 // pred_region
      %118 = vsyncadd [#allocation4], 0
      %s120 = sshll.u32 [#allocation8], 4
      %s121 = int_to_ptr.vmem [resolvable:$true] %s120
      %s122 = sshll.u32 %s3, 4
      %s123 = int_to_ptr.hbm [resolvable:$true] %s122
      %125 = dma.vmem_to_hbm [thread:$0]  %s121, 32, %s123, [#allocation4]
    $region29: #{tpu_custom_call.1} parent=1 // pred_fallthru
      _
    // Predicated region
    $region30: #{tpu_custom_call.1} parent=1 // pred_check
      _
    $region31: #{tpu_custom_call.1} parent=1 // pred_check_branch
      %127 = sbr.rel (0) target = $region33
    $region32: #{tpu_custom_call.1} parent=1 // pred_region
      %129 = vsyncadd [#allocation10], 0
      %s131 = sshll.u32 [#allocation9], 4
      %s132 = int_to_ptr.vmem [resolvable:$true] %s131
      %s133 = sshll.u32 %s4, 4
      %s134 = int_to_ptr.hbm [resolvable:$true] %s133
      %136 = dma.vmem_to_hbm [thread:$0]  %s132, 32, %s134, [#allocation10]
    $region33: #{tpu_custom_call.1} parent=1 // pred_fallthru
      _
    // Predicated region
    $region34: #{tpu_custom_call.1} parent=1 // pred_check
      _
    $region35: #{tpu_custom_call.1} parent=1 // pred_check_branch
      %138 = sbr.rel (0) target = $region37
    $region36: #{tpu_custom_call.1} parent=1 // pred_region
      %140 = dma.done [#allocation4], 32
    $region37: #{tpu_custom_call.1} parent=1 // pred_fallthru
      _
    // Predicated region
    $region38: #{tpu_custom_call.1} parent=1 // pred_check
      _
    $region39: #{tpu_custom_call.1} parent=1 // pred_check_branch
      %142 = sbr.rel (0) target = $region41
    $region40: #{tpu_custom_call.1} parent=1 // pred_region
      %144 = dma.done [#allocation10], 32
    $region41: #{tpu_custom_call.1} parent=1 // pred_fallthru
      _
    %145 = vsyncpa [#allocation3], 1
    %146 = vsyncpa [#allocation6], 1
    %147 = vsyncpa [#allocation4], 1
    %148 = vsyncpa [#allocation10], 1

</llo_original>
